<compile_context>
chip_gen: v5e
topology: v5e:2x2
jax: 0.10.0
libtpu: 0.0.40
codegen_flags: <defaults>
</compile_context>

<pallas_src>
import jax
import jax.numpy as jnp
from jax.experimental import pallas as pl
from jax.experimental.pallas import tpu as pltpu


def _round_up(a: int, b: int) -> int:
    return (a + b - 1) // b * b


def _make_mcmixmil_kernel(n_total: int, tile_n: int, n_tiles: int):
    def kernel(sig_a_ref, x_ref, w_ref, b_ref, y_probs_ref, y_prob_ref,
               run_max, run_row, run_sum):
        i = pl.program_id(0)

        @pl.when(i == 0)
        def _():
            run_max[...] = jnp.full_like(run_max, -jnp.inf)
            run_row[...] = jnp.zeros_like(run_row)
            run_sum[...] = jnp.zeros_like(run_sum)

        # Y_probs tile = x @ w + b   (bf16 MXU inputs, f32 accumulation)
        yp = jnp.dot(x_ref[...], w_ref[...],
                     preferred_element_type=jnp.float32) + b_ref[...]    # (TN, C) f32
        y_probs_ref[...] = yp

        # Valid-row mask for the (possibly) padded final tile.
        row_iota = jax.lax.broadcasted_iota(jnp.int32, (tile_n, 1), 0)   # (TN, 1)
        valid = (row_iota + i * tile_n) < n_total                        # (TN, 1)

        # Running column-sum of valid rows (for the mean over instances).
        run_sum[...] += jnp.sum(jnp.where(valid, yp, 0.0), axis=0, keepdims=True)

        # First row of this tile attaining max(Y_probs[:, 1:]) and its values
        # (extracted via a (TN,1) row mask instead of an (N,C) one-hot).
        sub = jnp.where(valid, yp[:, 1:], -jnp.inf)                      # (TN, C-1)
        row_max = jnp.max(sub, axis=1, keepdims=True)                    # (TN, 1)
        tile_max = jnp.max(row_max, axis=0, keepdims=True)               # (1, 1)
        first_row = jnp.min(
            jnp.where(row_max == tile_max, row_iota, tile_n),
            axis=0, keepdims=True)                                       # (1, 1)
        row_mask = row_iota == first_row                                 # (TN, 1)
        tile_row_vals = jnp.sum(jnp.where(row_mask, yp, 0.0),
                                axis=0, keepdims=True)                   # (1, C)

        # Strict '>' so earlier tiles win ties -> first-occurrence semantics of
        # torch.argmax over the whole (row-major) bag.
        better = tile_max > run_max[...]                                 # (1, 1)
        run_row[...] = jnp.where(better, tile_row_vals, run_row[...])
        run_max[...] = jnp.where(better, tile_max, run_max[...])

        @pl.when(i == n_tiles - 1)
        def _():
            sa = sig_a_ref[0, 0]                                         # SMEM scalar
            mean_yp = run_sum[...] * (1.0 / n_total)
            y_prob_ref[...] = sa * run_row[...] + (1.0 - sa) * mean_yp

    return kernel


def mcmixmil_forward(x, w, b, alpha, *, tile_n=512):
    """x: (N, D); w: (D, C); b: (C,); alpha: scalar.

    Returns (Y_prob (C,) f32, Y_probs (N, C) f32).
    """
    n, d = x.shape
    c = w.shape[1]

    # bf16 sublane packing is 16 rows; keep tiles 16-aligned and no larger than
    # the row-padded bag.
    tile_n = min(_round_up(int(tile_n), 16), _round_up(n, 16))
    n_pad = _round_up(n, tile_n)
    n_tiles = n_pad // tile_n

    x_b = jnp.pad(x.astype(jnp.bfloat16), ((0, n_pad - n), (0, 0)))
    w_b = w.astype(jnp.bfloat16)
    b2 = b.reshape(1, c).astype(jnp.float32)
    sig_alpha = jax.nn.sigmoid(jnp.asarray(alpha, jnp.float32)).reshape(1, 1)

    kernel = _make_mcmixmil_kernel(n, tile_n, n_tiles)

    y_probs_pad, y_prob2d = pl.pallas_call(
        kernel,
        out_shape=(
            jax.ShapeDtypeStruct((n_pad, c), jnp.float32),
            jax.ShapeDtypeStruct((1, c), jnp.float32),
        ),
        grid=(n_tiles,),
        in_specs=[
            pl.BlockSpec(memory_space=pltpu.MemorySpace.SMEM),       # sigmoid(alpha)
            pl.BlockSpec((tile_n, d), lambda i: (i, 0)),             # x tile (bf16)
            pl.BlockSpec((d, c), lambda i: (0, 0)),                  # weight (resident)
            pl.BlockSpec((1, c), lambda i: (0, 0)),                  # bias (resident)
        ],
        out_specs=(
            pl.BlockSpec((tile_n, c), lambda i: (i, 0)),             # Y_probs tile
            pl.BlockSpec((1, c), lambda i: (0, 0)),                  # Y_prob (final step)
        ),
        scratch_shapes=[
            pltpu.VMEM((1, 1), jnp.float32),   # running max of Y_probs[:, 1:]
            pltpu.VMEM((1, c), jnp.float32),   # row values at running argmax row
            pltpu.VMEM((1, c), jnp.float32),   # running column-sum (for the mean)
        ],
        compiler_params=pltpu.CompilerParams(
            dimension_semantics=("arbitrary",),
            vmem_limit_bytes=32 * 1024 * 1024,
        ),
    )(sig_alpha, x_b, w_b, b2)

    return y_prob2d[0], y_probs_pad[:n]


if __name__ == "__main__":
    key = jax.random.PRNGKey(0)
    kx, kw, kb = jax.random.split(key, 3)

    # Small shapes consistent with the module: N instances, input_size D, output_size C.
    # N=24 with tile_n=16 exercises the multi-tile carry and padded-final-tile masking.
    N, D, C = 24, 32, 4

    x = jax.random.normal(kx, (N, D), dtype=jnp.float32)

    # Deterministic analog of nn.Linear init: U(-1/sqrt(D), 1/sqrt(D)).
    bound = 1.0 / float(D) ** 0.5
    w_pt = jax.random.uniform(kw, (C, D), minval=-bound, maxval=bound,
                              dtype=jnp.float32)          # PyTorch layout (out, in)
    b = jax.random.uniform(kb, (C,), minval=-bound, maxval=bound,
                           dtype=jnp.float32)
    alpha = jnp.float32(0.5)

    y_prob, y_probs = mcmixmil_forward(x, w_pt.T, b, alpha, tile_n=16)
    jax.block_until_ready((y_prob, y_probs))

    # Pure-JAX reference of the PyTorch forward (same bf16 MXU inputs, f32 accum).
    yp_ref = jnp.dot(x.astype(jnp.bfloat16), w_pt.T.astype(jnp.bfloat16),
                     preferred_element_type=jnp.float32) + b
    sig = jax.nn.sigmoid(alpha)
    row = jnp.argmax(yp_ref[:, 1:]) // (C - 1)
    y_max_ref = yp_ref[row]
    y_prob_ref = sig * y_max_ref + (1.0 - sig) * jnp.mean(yp_ref, axis=0)

    assert y_probs.shape == (N, C) and y_prob.shape == (C,)
    assert jnp.allclose(y_probs, yp_ref, atol=1e-4, rtol=1e-4)
    assert jnp.allclose(y_prob, y_prob_ref, atol=1e-4, rtol=1e-4)

    print("KERNEL_OK")
</pallas_src>

<mosaic_0001>
module attributes {stable_mosaic.version = 11 : i64} {
  func.func @kernel(%arg0: i32, %arg1: memref<1x1xf32, #tpu.memory_space<smem>>, %arg2: memref<16x32xbf16, #tpu.memory_space<vmem>>, %arg3: memref<32x4xbf16, #tpu.memory_space<vmem>>, %arg4: memref<1x4xf32, #tpu.memory_space<vmem>>, %arg5: memref<16x4xf32, #tpu.memory_space<vmem>>, %arg6: memref<1x4xf32, #tpu.memory_space<vmem>>, %arg7: memref<1x1xf32, #tpu.memory_space<vmem>>, %arg8: memref<1x4xf32, #tpu.memory_space<vmem>>, %arg9: memref<1x4xf32, #tpu.memory_space<vmem>>) attributes {dimension_semantics = [#tpu.dimension_semantics<arbitrary>], iteration_bounds = array<i64: 2>, scalar_prefetch = 0 : i64, scratch_operands = 3 : i64, tpu.core_type = #tpu.core_type<tc>, window_params = [{transform_indices = @transform_0, window_bounds = array<i64: 1, 1>}, {transform_indices = @transform_1, window_bounds = array<i64: 16, 32>}, {pipeline_mode = #tpu.pipeline_mode<synchronous>, transform_indices = @transform_2, window_bounds = array<i64: 32, 4>}, {pipeline_mode = #tpu.pipeline_mode<synchronous>, transform_indices = @transform_3, window_bounds = array<i64: 1, 4>}, {transform_indices = @transform_4, window_bounds = array<i64: 16, 4>}, {pipeline_mode = #tpu.pipeline_mode<synchronous>, transform_indices = @transform_5, window_bounds = array<i64: 1, 4>}]} {
    %c0_i32 = arith.constant 0 : i32
    %0 = arith.cmpi eq, %arg0, %c0_i32 : i32
    %1 = arith.extui %0 : i1 to i32
    %c0_i32_0 = arith.constant 0 : i32
    %2 = arith.cmpi ne, %1, %c0_i32_0 : i32
    scf.if %2 {
      %cst_32 = arith.constant 0xFF800000 : f32
      %61 = vector.broadcast %cst_32 : f32 to vector<1x1xf32>
      %c0_33 = arith.constant 0 : index
      %c0_34 = arith.constant 0 : index
      %62 = vector.load %arg7[%c0_33, %c0_34] : memref<1x1xf32, #tpu.memory_space<vmem>>, vector<1x1xf32>
      tpu.vector_store %arg7[%c0_33, %c0_34], %61 {strides = array<i32>} : memref<1x1xf32, #tpu.memory_space<vmem>>, vector<1x1xf32>,
      %cst_35 = arith.constant 0.000000e+00 : f32
      %63 = vector.broadcast %cst_35 : f32 to vector<1x4xf32>
      %c0_36 = arith.constant 0 : index
      %c0_37 = arith.constant 0 : index
      %64 = vector.load %arg8[%c0_36, %c0_37] : memref<1x4xf32, #tpu.memory_space<vmem>>, vector<1x4xf32>
      tpu.vector_store %arg8[%c0_36, %c0_37], %63 {strides = array<i32>} : memref<1x4xf32, #tpu.memory_space<vmem>>, vector<1x4xf32>,
      %cst_38 = arith.constant 0.000000e+00 : f32
      %65 = vector.broadcast %cst_38 : f32 to vector<1x4xf32>
      %c0_39 = arith.constant 0 : index
      %c0_40 = arith.constant 0 : index
      %66 = vector.load %arg9[%c0_39, %c0_40] : memref<1x4xf32, #tpu.memory_space<vmem>>, vector<1x4xf32>
      tpu.vector_store %arg9[%c0_39, %c0_40], %65 {strides = array<i32>} : memref<1x4xf32, #tpu.memory_space<vmem>>, vector<1x4xf32>,
    } else {
    }
    %c0 = arith.constant 0 : index
    %c0_1 = arith.constant 0 : index
    %3 = vector.load %arg2[%c0, %c0_1] : memref<16x32xbf16, #tpu.memory_space<vmem>>, vector<16x32xbf16>
    %c0_2 = arith.constant 0 : index
    %c0_3 = arith.constant 0 : index
    %4 = vector.load %arg3[%c0_2, %c0_3] : memref<32x4xbf16, #tpu.memory_space<vmem>>, vector<32x4xbf16>
    %cst = arith.constant dense<0.000000e+00> : vector<16x4xf32>
    %5 = tpu.matmul %3, %4, %cst {dimension_numbers = #tpu.dot_dimension_numbers<[1], [0], [0], [1], [0, 0, 1, 1], [], []>} : vector<16x32xbf16>, vector<32x4xbf16>, vector<16x4xf32> -> vector<16x4xf32>
    %c0_4 = arith.constant 0 : index
    %c0_5 = arith.constant 0 : index
    %6 = vector.load %arg4[%c0_4, %c0_5] : memref<1x4xf32, #tpu.memory_space<vmem>>, vector<1x4xf32>
    %7 = vector.broadcast %6 : vector<1x4xf32> to vector<16x4xf32>
    %8 = arith.addf %5, %7 : vector<16x4xf32>
    %c0_6 = arith.constant 0 : index
    %c0_7 = arith.constant 0 : index
    %9 = vector.load %arg5[%c0_6, %c0_7] : memref<16x4xf32, #tpu.memory_space<vmem>>, vector<16x4xf32>
    tpu.vector_store %arg5[%c0_6, %c0_7], %8 {strides = array<i32>} : memref<16x4xf32, #tpu.memory_space<vmem>>, vector<16x4xf32>,
    %10 = tpu.iota {dimensions = array<i32: 0>} : vector<16x1xi32>
    %c16_i32 = arith.constant 16 : i32
    %11 = arith.muli %arg0, %c16_i32 : i32
    %12 = vector.broadcast %11 : i32 to vector<16x1xi32>
    %13 = arith.addi %10, %12 : vector<16x1xi32>
    %c24_i32 = arith.constant 24 : i32
    %14 = vector.broadcast %c24_i32 : i32 to vector<16x1xi32>
    %15 = arith.cmpi slt, %13, %14 : vector<16x1xi32>
    %c0_8 = arith.constant 0 : index
    %c0_9 = arith.constant 0 : index
    %16 = vector.load %arg9[%c0_8, %c0_9] : memref<1x4xf32, #tpu.memory_space<vmem>>, vector<1x4xf32>
    %cst_10 = arith.constant 0.000000e+00 : f32
    %17 = vector.shape_cast %15 : vector<16x1xi1> to vector<16x1xi1>
    %18 = vector.broadcast %17 : vector<16x1xi1> to vector<16x4xi1>
    %19 = vector.broadcast %cst_10 : f32 to vector<16x4xf32>
    %20 = arith.select %18, %8, %19 : vector<16x4xi1>, vector<16x4xf32>
    %cst_11 = arith.constant dense<0.000000e+00> : vector<4xf32>
    %21 = vector.multi_reduction <add>, %20, %cst_11 [0] : vector<16x4xf32> to vector<4xf32>
    %22 = vector.shape_cast %21 : vector<4xf32> to vector<1x4xf32>
    %23 = arith.addf %16, %22 : vector<1x4xf32>
    %c0_12 = arith.constant 0 : index
    %c0_13 = arith.constant 0 : index
    %24 = vector.load %arg9[%c0_12, %c0_13] : memref<1x4xf32, #tpu.memory_space<vmem>>, vector<1x4xf32>
    tpu.vector_store %arg9[%c0_12, %c0_13], %23 {strides = array<i32>} : memref<1x4xf32, #tpu.memory_space<vmem>>, vector<1x4xf32>,
    %25 = vector.extract_strided_slice %8 {offsets = [0, 1], sizes = [16, 3], strides = [1, 1]} : vector<16x4xf32> to vector<16x3xf32>
    %cst_14 = arith.constant 0xFF800000 : f32
    %26 = vector.shape_cast %15 : vector<16x1xi1> to vector<16x1xi1>
    %27 = vector.broadcast %26 : vector<16x1xi1> to vector<16x3xi1>
    %28 = vector.broadcast %cst_14 : f32 to vector<16x3xf32>
    %29 = arith.select %27, %25, %28 : vector<16x3xi1>, vector<16x3xf32>
    %cst_15 = arith.constant dense<0xFF800000> : vector<16xf32>
    %30 = vector.multi_reduction <maximumf>, %29, %cst_15 [1] : vector<16x3xf32> to vector<16xf32>
    %31 = vector.shape_cast %30 : vector<16xf32> to vector<16x1xf32>
    %cst_16 = arith.constant dense<0xFF800000> : vector<1xf32>
    %32 = vector.multi_reduction <maximumf>, %31, %cst_16 [0] : vector<16x1xf32> to vector<1xf32>
    %33 = vector.shape_cast %32 : vector<1xf32> to vector<1x1xf32>
    %34 = vector.broadcast %33 : vector<1x1xf32> to vector<16x1xf32>
    %35 = arith.cmpf oeq, %31, %34 : vector<16x1xf32>
    %c16_i32_17 = arith.constant 16 : i32
    %36 = vector.broadcast %c16_i32_17 : i32 to vector<16x1xi32>
    %37 = arith.select %35, %10, %36 : vector<16x1xi1>, vector<16x1xi32>
    %cst_18 = arith.constant dense<2147483647> : vector<1xi32>
    %38 = vector.multi_reduction <minsi>, %37, %cst_18 [0] : vector<16x1xi32> to vector<1xi32>
    %39 = vector.shape_cast %38 : vector<1xi32> to vector<1x1xi32>
    %40 = vector.broadcast %39 : vector<1x1xi32> to vector<16x1xi32>
    %41 = arith.cmpi eq, %10, %40 : vector<16x1xi32>
    %cst_19 = arith.constant 0.000000e+00 : f32
    %42 = vector.shape_cast %41 : vector<16x1xi1> to vector<16x1xi1>
    %43 = vector.broadcast %42 : vector<16x1xi1> to vector<16x4xi1>
    %44 = vector.broadcast %cst_19 : f32 to vector<16x4xf32>
    %45 = arith.select %43, %8, %44 : vector<16x4xi1>, vector<16x4xf32>
    %cst_20 = arith.constant dense<0.000000e+00> : vector<4xf32>
    %46 = vector.multi_reduction <add>, %45, %cst_20 [0] : vector<16x4xf32> to vector<4xf32>
    %47 = vector.shape_cast %46 : vector<4xf32> to vector<1x4xf32>
    %c0_21 = arith.constant 0 : index
    %c0_22 = arith.constant 0 : index
    %48 = vector.load %arg7[%c0_21, %c0_22] : memref<1x1xf32, #tpu.memory_space<vmem>>, vector<1x1xf32>
    %49 = arith.cmpf ogt, %33, %48 : vector<1x1xf32>
    %c0_23 = arith.constant 0 : index
    %c0_24 = arith.constant 0 : index
    %50 = vector.load %arg8[%c0_23, %c0_24] : memref<1x4xf32, #tpu.memory_space<vmem>>, vector<1x4xf32>
    %51 = vector.shape_cast %49 : vector<1x1xi1> to vector<1x1xi1>
    %52 = vector.broadcast %51 : vector<1x1xi1> to vector<1x4xi1>
    %53 = arith.select %52, %47, %50 : vector<1x4xi1>, vector<1x4xf32>
    %c0_25 = arith.constant 0 : index
    %c0_26 = arith.constant 0 : index
    %54 = vector.load %arg8[%c0_25, %c0_26] : memref<1x4xf32, #tpu.memory_space<vmem>>, vector<1x4xf32>
    tpu.vector_store %arg8[%c0_25, %c0_26], %53 {strides = array<i32>} : memref<1x4xf32, #tpu.memory_space<vmem>>, vector<1x4xf32>,
    %c0_27 = arith.constant 0 : index
    %c0_28 = arith.constant 0 : index
    %55 = vector.load %arg7[%c0_27, %c0_28] : memref<1x1xf32, #tpu.memory_space<vmem>>, vector<1x1xf32>
    %56 = arith.select %49, %33, %55 : vector<1x1xi1>, vector<1x1xf32>
    %c0_29 = arith.constant 0 : index
    %c0_30 = arith.constant 0 : index
    %57 = vector.load %arg7[%c0_29, %c0_30] : memref<1x1xf32, #tpu.memory_space<vmem>>, vector<1x1xf32>
    tpu.vector_store %arg7[%c0_29, %c0_30], %56 {strides = array<i32>} : memref<1x1xf32, #tpu.memory_space<vmem>>, vector<1x1xf32>,
    %c1_i32 = arith.constant 1 : i32
    %58 = arith.cmpi eq, %arg0, %c1_i32 : i32
    %59 = arith.extui %58 : i1 to i32
    %c0_i32_31 = arith.constant 0 : i32
    %60 = arith.cmpi ne, %59, %c0_i32_31 : i32
    scf.if %60 {
      %c0_32 = arith.constant 0 : index
      %c0_33 = arith.constant 0 : index
      %61 = memref.load %arg1[%c0_32, %c0_33] : memref<1x1xf32, #tpu.memory_space<smem>>
      %c0_34 = arith.constant 0 : index
      %c0_35 = arith.constant 0 : index
      %62 = vector.load %arg9[%c0_34, %c0_35] : memref<1x4xf32, #tpu.memory_space<vmem>>, vector<1x4xf32>
      %cst_36 = arith.constant 0.0416666679 : f32
      %63 = vector.broadcast %cst_36 : f32 to vector<1x4xf32>
      %64 = arith.mulf %62, %63 : vector<1x4xf32>
      %c0_37 = arith.constant 0 : index
      %c0_38 = arith.constant 0 : index
      %65 = vector.load %arg8[%c0_37, %c0_38] : memref<1x4xf32, #tpu.memory_space<vmem>>, vector<1x4xf32>
      %66 = vector.broadcast %61 : f32 to vector<1x4xf32>
      %67 = arith.mulf %66, %65 : vector<1x4xf32>
      %cst_39 = arith.constant 1.000000e+00 : f32
      %68 = arith.subf %cst_39, %61 : f32
      %69 = vector.broadcast %68 : f32 to vector<1x4xf32>
      %70 = arith.mulf %69, %64 : vector<1x4xf32>
      %71 = arith.addf %67, %70 : vector<1x4xf32>
      %c0_40 = arith.constant 0 : index
      %c0_41 = arith.constant 0 : index
      %72 = vector.load %arg6[%c0_40, %c0_41] : memref<1x4xf32, #tpu.memory_space<vmem>>, vector<1x4xf32>
      tpu.vector_store %arg6[%c0_40, %c0_41], %71 {strides = array<i32>} : memref<1x4xf32, #tpu.memory_space<vmem>>, vector<1x4xf32>,
    } else {
    }
    return
  }
  func.func @transform_0(%arg0: i32) -> (i32, i32) {
    %c0_i32 = arith.constant 0 : i32
    %c0_i32_0 = arith.constant 0 : i32
    %c0_i32_1 = arith.constant 0 : i32
    return %c0_i32, %c0_i32_0 : i32, i32
  }
  func.func @transform_1(%arg0: i32) -> (i32, i32) {
    %c0_i32 = arith.constant 0 : i32
    %c0_i32_0 = arith.constant 0 : i32
    return %arg0, %c0_i32 : i32, i32
  }
  func.func @transform_2(%arg0: i32) -> (i32, i32) {
    %c0_i32 = arith.constant 0 : i32
    %c0_i32_0 = arith.constant 0 : i32
    %c0_i32_1 = arith.constant 0 : i32
    return %c0_i32, %c0_i32_0 : i32, i32
  }
  func.func @transform_3(%arg0: i32) -> (i32, i32) {
    %c0_i32 = arith.constant 0 : i32
    %c0_i32_0 = arith.constant 0 : i32
    %c0_i32_1 = arith.constant 0 : i32
    return %c0_i32, %c0_i32_0 : i32, i32
  }
  func.func @transform_4(%arg0: i32) -> (i32, i32) {
    %c0_i32 = arith.constant 0 : i32
    %c0_i32_0 = arith.constant 0 : i32
    return %arg0, %c0_i32 : i32, i32
  }
  func.func @transform_5(%arg0: i32) -> (i32, i32) {
    %c0_i32 = arith.constant 0 : i32
    %c0_i32_0 = arith.constant 0 : i32
    %c0_i32_1 = arith.constant 0 : i32
    return %c0_i32, %c0_i32_0 : i32, i32
  }
}

</mosaic_0001>

<llo_original>
// kernel: tpu_custom_call.1
$region0: #{tpu_custom_call.1}
  #allocation0 [shape = 'u32[]', space=smem, size = 0x4, offset = 0x4, fixed_abs, tag = 'smem constant byte address 0x4 - core index']
  #allocation1 [shape = 'u32[72,128]{1,0:T(1,128)}', space=vmem, size = 0x9000, scoped, tag = 'internal scratch']
  #allocation2 [shape = 'f32[1,1]{1,0:T(1,128)}', space=vmem, size = 0x200, scoped, tag = 'scratch operand']
  #allocation3 [shape = 'f32[1,4]{1,0:T(1,128)}', space=vmem, size = 0x200, scoped, tag = 'scratch operand']
  #allocation4 [shape = 'f32[1,4]{1,0:T(1,128)}', space=vmem, size = 0x200, scoped, tag = 'scratch operand']
  #allocation5 [shape = 'f32[1,1]{1,0:T(1,128)S(6)}', space=smem, size = 0x200, scoped, tag = 'scoped memory for tpu_custom_call.1']
  %s0 = inlined_call_operand.<no memory space> [shape: f32[1,1], index: 0, kind: input, shape index: {}]
  %s1 = inlined_call_operand.vmem [shape: bf16[32,32], index: 1, kind: input, shape index: {}]
  %s2 = inlined_call_operand.vmem [shape: bf16[32,4], index: 2, kind: input, shape index: {}]
  %s3 = inlined_call_operand.vmem [shape: f32[1,4], index: 3, kind: input, shape index: {}]
  %s4 = inlined_call_operand.vmem [shape: f32[32,4], index: 4, kind: output, shape index: {0}]
  %s5 = inlined_call_operand.hbm [shape: f32[1,4], index: 5, kind: output, shape index: {1}]
  %6 = xla_tuple %s4, %s5
  %s7 = sld [smem:[#allocation0]]
  $region65: #{tpu_custom_call.1} parent=0
    _
  %s9 = ssub.s32 1, %s7
  %s10 = scalar_select 0, %s9, %s7
  %11 = sst [smem:[#allocation5]] %s0
  $region1: #{tpu_custom_call.1} parent=0
    #allocation6 [shape = 'u8[512]{0}', space=vmem, size = 0x400, scoped, tag = 'output window, operand 1, single buffered']
    #allocation7 [shape = 's32[2]{0}', space=sflag, size = 0x8, scoped, tag = 'scoped memory for tpu_custom_call.1']
    %12 = vsyncpa [#allocation7], 0
    loop: start=0, step=1, limit=4
    $region2: #{tpu_custom_call.1} parent=1 // loop_pre_header
      _
    $region3: #{tpu_custom_call.1} parent=1 // loop_header
      %s14 = sphi 0, %s18
      %p15 = scmp.ge.s32.totalorder %s14, 4
      %s22 = sphi 0, %s22
      %s24 = sphi 0, %s22
      %s25 = sphi 0, %s24
      %s39 = sphi 0, %s25
      %s45 = sphi 0, %s47
      %s48 = sphi 0, %s45
      %s49 = sphi 0, %s48
      %s65 = sphi 0, %s49
      %s69 = sphi 0, %s69
      %s71 = sphi 0, %s69
      %s72 = sphi 0, %s71
      %s86 = sphi 0, %s72
      %s90 = sphi 0, %s90
      %s92 = sphi 0, %s90
      %s93 = sphi 0, %s92
      %s107 = sphi 0, %s93
      %s113 = sphi 0, %s115
      %s116 = sphi 0, %s113
      %s117 = sphi 0, %s116
      %s133 = sphi 0, %s117
      %s137 = sphi 0, %s137
      %s139 = sphi 0, %s137
      %s140 = sphi 0, %s139
      %s154 = sphi 0, %s140
    $region4: #{tpu_custom_call.1} parent=1 // loop_header_branch
      %17 = sbr.rel (%p15) target = $region8
    $region5: #{tpu_custom_call.1} parent=1 // loop_body
      %s19 = ssub.s32 %s14, 1
      %s20 = ssub.s32 %s14, 2
      %s21 = sadd.s32 %s14, 1
      %s23 = sadd.s32 %s22, 1
      %p26 = scmp.eq.s32.totalorder %s14, 1
      %p27 = scmp.ne.s32.totalorder %s22, %s24
      %p28 = scmp.eq.s32.totalorder %s14, 0
      %p29 = por %p27, %p28
      %p30 = scmp.ne.s32.totalorder %s22, %s24
      %p31 = scmp.eq.s32.totalorder %s19, 1
      %p32 = por %p30, %p31
      %p33 = scmp.ne.s32.totalorder %s24, %s25
      %p34 = scmp.eq.s32.totalorder %s19, 0
      %p35 = por %p33, %p34
      %p36 = scmp.ne.s32.totalorder %s24, %s25
      %p37 = scmp.eq.s32.totalorder %s20, 1
      %p38 = por %p36, %p37
      %p40 = scmp.ne.s32.totalorder %s25, %s39
      %p41 = scmp.eq.s32.totalorder %s20, 0
      %p42 = por %p40, %p41
      %s43 = ssub.s32 %s14, %s21
      %p44 = scmp.eq.s32.totalorder %s43, 0
      %s46 = sadd.s32 %s45, 1
      %s47 = scalar_select %p44, %s45, %s46
      %p50 = pneg %p44
      %p51 = scmp.eq.s32.totalorder %s14, 1
      %p52 = por %p50, %p51
      %p53 = scmp.ne.s32.totalorder %s45, %s48
      %p54 = scmp.eq.s32.totalorder %s14, 0
      %p55 = por %p53, %p54
      %p56 = scmp.ne.s32.totalorder %s45, %s48
      %p57 = scmp.eq.s32.totalorder %s19, 1
      %p58 = por %p56, %p57
      %p59 = scmp.ne.s32.totalorder %s48, %s49
      %p60 = scmp.eq.s32.totalorder %s19, 0
      %p61 = por %p59, %p60
      %p62 = scmp.ne.s32.totalorder %s48, %s49
      %p63 = scmp.eq.s32.totalorder %s20, 1
      %p64 = por %p62, %p63
      %p66 = scmp.ne.s32.totalorder %s49, %s65
      %p67 = scmp.eq.s32.totalorder %s20, 0
      %p68 = por %p66, %p67
      %s70 = sadd.s32 %s69, 1
      %p73 = scmp.eq.s32.totalorder %s14, 1
      %p74 = scmp.ne.s32.totalorder %s69, %s71
      %p75 = scmp.eq.s32.totalorder %s14, 0
      %p76 = por %p74, %p75
      %p77 = scmp.ne.s32.totalorder %s69, %s71
      %p78 = scmp.eq.s32.totalorder %s19, 1
      %p79 = por %p77, %p78
      %p80 = scmp.ne.s32.totalorder %s71, %s72
      %p81 = scmp.eq.s32.totalorder %s19, 0
      %p82 = por %p80, %p81
      %p83 = scmp.ne.s32.totalorder %s71, %s72
      %p84 = scmp.eq.s32.totalorder %s20, 1
      %p85 = por %p83, %p84
      %p87 = scmp.ne.s32.totalorder %s72, %s86
      %p88 = scmp.eq.s32.totalorder %s20, 0
      %p89 = por %p87, %p88
      %s91 = sadd.s32 %s90, 1
      %p94 = scmp.eq.s32.totalorder %s14, 1
      %p95 = scmp.ne.s32.totalorder %s90, %s92
      %p96 = scmp.eq.s32.totalorder %s14, 0
      %p97 = por %p95, %p96
      %p98 = scmp.ne.s32.totalorder %s90, %s92
      %p99 = scmp.eq.s32.totalorder %s19, 1
      %p100 = por %p98, %p99
      %p101 = scmp.ne.s32.totalorder %s92, %s93
      %p102 = scmp.eq.s32.totalorder %s19, 0
      %p103 = por %p101, %p102
      %p104 = scmp.ne.s32.totalorder %s92, %s93
      %p105 = scmp.eq.s32.totalorder %s20, 1
      %p106 = por %p104, %p105
      %p108 = scmp.ne.s32.totalorder %s93, %s107
      %p109 = scmp.eq.s32.totalorder %s20, 0
      %p110 = por %p108, %p109
      %s111 = ssub.s32 %s14, %s21
      %p112 = scmp.eq.s32.totalorder %s111, 0
      %s114 = sadd.s32 %s113, 1
      %s115 = scalar_select %p112, %s113, %s114
      %p118 = pneg %p112
      %p119 = scmp.eq.s32.totalorder %s14, 1
      %p120 = por %p118, %p119
      %p121 = scmp.ne.s32.totalorder %s113, %s116
      %p122 = scmp.eq.s32.totalorder %s14, 0
      %p123 = por %p121, %p122
      %p124 = scmp.ne.s32.totalorder %s113, %s116
      %p125 = scmp.eq.s32.totalorder %s19, 1
      %p126 = por %p124, %p125
      %p127 = scmp.ne.s32.totalorder %s116, %s117
      %p128 = scmp.eq.s32.totalorder %s19, 0
      %p129 = por %p127, %p128
      %p130 = scmp.ne.s32.totalorder %s116, %s117
      %p131 = scmp.eq.s32.totalorder %s20, 1
      %p132 = por %p130, %p131
      %p134 = scmp.ne.s32.totalorder %s117, %s133
      %p135 = scmp.eq.s32.totalorder %s20, 0
      %p136 = por %p134, %p135
      %s138 = sadd.s32 %s137, 1
      %p141 = scmp.eq.s32.totalorder %s14, 1
      %p142 = scmp.ne.s32.totalorder %s137, %s139
      %p143 = scmp.eq.s32.totalorder %s14, 0
      %p144 = por %p142, %p143
      %p145 = scmp.ne.s32.totalorder %s137, %s139
      %p146 = scmp.eq.s32.totalorder %s19, 1
      %p147 = por %p145, %p146
      %p148 = scmp.ne.s32.totalorder %s139, %s140
      %p149 = scmp.eq.s32.totalorder %s19, 0
      %p150 = por %p148, %p149
      %p151 = scmp.ne.s32.totalorder %s139, %s140
      %p152 = scmp.eq.s32.totalorder %s20, 1
      %p153 = por %p151, %p152
      %p155 = scmp.ne.s32.totalorder %s140, %s154
      %p156 = scmp.eq.s32.totalorder %s20, 0
      %p157 = por %p155, %p156
      %p158 = scmp.le.s32.totalorder 1, %s14
      %p159 = scmp.lt.s32.totalorder %s14, 3
      %p160 = pnand %p158, %p159
      %p161 = pneg %p160
      // Predicated region
      $region9: #{tpu_custom_call.1} parent=5 // pred_check
        _
      $region10: #{tpu_custom_call.1} parent=5 // pred_check_branch
        %163 = sbr.rel (%p160) target = $region12
      $region11: #{tpu_custom_call.1} parent=5 // pred_region
        %s164 = ssub.s32 %s14, 1
        // Predicated region
        $region13: #{tpu_custom_call.1} parent=11 // pred_check
          %p165 = pneg %p35
        $region14: #{tpu_custom_call.1} parent=11 // pred_check_branch
          %167 = sbr.rel (%p165) target = $region16
        $region15: #{tpu_custom_call.1} parent=11 // pred_region
          _
        $region16: #{tpu_custom_call.1} parent=11 // pred_fallthru
          _
        // Predicated region
        $region17: #{tpu_custom_call.1} parent=11 // pred_check
          %p168 = pneg %p82
        $region18: #{tpu_custom_call.1} parent=11 // pred_check_branch
          %170 = sbr.rel (%p168) target = $region20
        $region19: #{tpu_custom_call.1} parent=11 // pred_region
          _
        $region20: #{tpu_custom_call.1} parent=11 // pred_fallthru
          _
        // Predicated region
        $region21: #{tpu_custom_call.1} parent=11 // pred_check
          %p171 = pneg %p103
        $region22: #{tpu_custom_call.1} parent=11 // pred_check_branch
          %173 = sbr.rel (%p171) target = $region24
        $region23: #{tpu_custom_call.1} parent=11 // pred_region
          _
        $region24: #{tpu_custom_call.1} parent=11 // pred_fallthru
          _
      $region12: #{tpu_custom_call.1} parent=5 // pred_fallthru
        _
      %p174 = scmp.lt.s32.totalorder %s14, 2
      // Predicated region
      $region25: #{tpu_custom_call.1} parent=5 // pred_check
        %p175 = pneg %p174
      $region26: #{tpu_custom_call.1} parent=5 // pred_check_branch
        %177 = sbr.rel (%p175) target = $region28
      $region27: #{tpu_custom_call.1} parent=5 // pred_region
        // Predicated region
        $region29: #{tpu_custom_call.1} parent=27 // pred_check
          %p178 = pneg %p55
        $region30: #{tpu_custom_call.1} parent=27 // pred_check_branch
          %180 = sbr.rel (%p178) target = $region32
        $region31: #{tpu_custom_call.1} parent=27 // pred_region
          %s181 = smul.u32 2, %s14
          %p182 = scmp.lt.s32.totalorder %s181, 3
          %s183 = scalar_select %p182, %s181, 3
          %s184 = smul.addr %s183, 4
          %s185 = scalar_lea.vmem %s1, %s184
          %s186 = smul.u32 2, %s14
        $region32: #{tpu_custom_call.1} parent=27 // pred_fallthru
          _
      $region28: #{tpu_custom_call.1} parent=5 // pred_fallthru
        _
      %p187 = scmp.le.s32.totalorder 1, %s14
      %p188 = scmp.lt.s32.totalorder %s14, 3
      %p189 = pnand %p187, %p188
      %p190 = pneg %p189
      // Predicated region
      $region33: #{tpu_custom_call.1} parent=5 // pred_check
        _
      $region34: #{tpu_custom_call.1} parent=5 // pred_check_branch
        %192 = sbr.rel (%p189) target = $region36
      $region35: #{tpu_custom_call.1} parent=5 // pred_region
        %s193 = ssub.s32 %s14, 1
        %p194 = pneg %p35
        %p195 = pneg %p32
        %s196 = smul.u32 2, %s19
        %p197 = scmp.lt.s32.totalorder %s196, 3
        %s198 = scalar_select %p197, %s196, 3
        %s199 = smul.addr %s198, 4
        %s200 = scalar_lea.vmem %s1, %s199
        %p201 = pneg %p61
        %p202 = pneg %p58
        %p203 = pneg %p82
        %p204 = pneg %p79
        %p205 = pneg %p103
        %p206 = pneg %p100
        %p207 = pneg %p129
        %p208 = pneg %p126
        %s209 = smul.u32 2, %s19
        %p210 = scmp.lt.s32.totalorder %s209, 3
        %s211 = scalar_select %p210, %s209, 3
        %s212 = smul.addr %s211, 8
        %s213 = scalar_lea.vmem %s4, %s212
        %p214 = pneg %p150
        %p215 = pneg %p147
        %s216 = smul.u32 2, %s19
        %p217 = scmp.lt.s32.totalorder %s216, 3
        %s218 = scalar_select %p217, %s216, 3
        %s219 = smul.addr %s218, 4
        %s220 = scalar_lea.vmem %s1, %s219
        %s221 = smul.u32 2, %s19
        %s222 = smul.u32 2, %s19
        %p223 = scmp.lt.s32.totalorder %s222, 3
        %s224 = scalar_select %p223, %s222, 3
        %s225 = smul.addr %s224, 8
        %s226 = scalar_lea.vmem %s4, %s225
        %s227 = smul.u32 2, %s19
        %p229 = scmp.eq.s32.totalorder %s19, 0
        // Predicated region
        $region37: #{tpu_custom_call.1} parent=35 // pred_check
          %p230 = pneg %p229
        $region38: #{tpu_custom_call.1} parent=35 // pred_check_branch
          %232 = sbr.rel (%p230) target = $region40
        $region39: #{tpu_custom_call.1} parent=35 // pred_region
          %vm233 = vcmask 0
          %234 = vst.msk [vmem:[#allocation2] sm:$0x1] %vm233, -inf
          %vm235 = vcmask 24576
          %236 = vst.msk [vmem:[#allocation3] sm:$0x1] %vm235, 0.0
          %237 = vst.msk [vmem:[#allocation4] sm:$0x1] %vm235, 0.0
        $region40: #{tpu_custom_call.1} parent=35 // pred_fallthru
          _
        %v238 = vld [vmem:[%s220] sm:$0xf]
        %v239 = vld [vmem:[%s220 + $0x4] sm:$0xf]
        %v240 = vld [vmem:[%s2] sm:$0xf]
        %v241 = vld [vmem:[%s2 + $0x4] sm:$0xf]
        %v242 = vld [vmem:[%s2 + $0x8] sm:$0xf]
        %v243 = vld [vmem:[%s2 + $0xc] sm:$0xf]
        %v244 = vld [vmem:[%s3] sm:$0x1]
        %v246 = vperm.slane %v244, 0
        %v250 = vunpack.c.l.b16 %v238
        %v251 = vunpack.c.l.b16 %v239
        %v252 = vpack.c.b16 %v251, %v250
        %v257 = vunpack.c.l.b16 %v240
        %v258 = vunpack.c.l.b16 %v241
        %v259 = vunpack.c.l.b16 %v242
        %v260 = vunpack.c.l.b16 %v243
        %v261 = vpack.c.b16 %v258, %v257
        %v262 = vpack.c.b16 %v260, %v259
        %vm265 = vcmask 261120
        %v267 = vsel %vm265, %v252, 0
        %269 = vmatpush.bf16.msra.mxu0 0
        %270 = vmatpush.bf16.msra.mxu0 0
        %271 = vmatpush.bf16.msra.mxu0 0
        %272 = vmatpush.bf16.msra.mxu0 0
        %273 = vmatpush.bf16.msra.mxu0 0
        %274 = vmatpush.bf16.msra.mxu0 0
        %275 = vmatpush.bf16.msra.mxu0 %v262
        %276 = vmatpush.bf16.msra.mxu0 %v261
        %277 = vmatmul.bf16.gmra.mxu0 %v267
        %v278 = vpop.f32.mrf.mxu0
        %v279 = vadd.f32 %v246, %v278
        %v280 = vpop.f32.mrf.mxu0
        %v281 = vadd.f32 %v246, %v280
        %282 = vdwg.mxu0
        %vm283 = vcmask 31744
        %284 = vst.msk [vmem:[%s226] sm:$0xff] %vm283, %v279
        %285 = vst.msk [vmem:[%s226 + $0x8] sm:$0xff] %vm283, %v281
        %v286 = vlaneseq
        %v287 = vshrl.u32 %v286, 7
        %v288 = vadd.s32 %v287, 8
        %s289 = smul.u32 %s19, 16
        %v290 = vstv %s289
        %v291 = vadd.s32 %v287, %v290
        %v292 = vadd.s32 %v288, %v290
        %vm293 = vcmp.lt.s32.totalorder %v291, 24
        %vm294 = vcmp.lt.s32.totalorder %v292, 24
        %v295 = vld [vmem:[#allocation4] sm:$0x1]
        %v296 = vsel %vm293, 1, 0
        %v297 = vsel %vm294, 1, 0
        %vm298 = vcmp.eq.s32.totalorder %v296, 1
        %vm299 = vcmp.eq.s32.totalorder %v297, 1
        %v300 = vsel %vm298, %v279, 0.0
        %v301 = vsel %vm299, %v281, 0.0
        %v302 = vsel %vm283, %v300, 0.0
        %v303 = vsel %vm283, %v301, 0.0
        %v304 = vadd.f32 %v302, %v303
        %v305 = vrot.slane %v304, 4
        %v306 = vadd.f32 %v304, %v305
        %v307 = vrot.slane %v306, 2
        %v308 = vadd.f32 %v306, %v307
        %v309 = vrot.slane %v308, 1
        %v310 = vadd.f32 %v308, %v309
        %v311 = vadd.f32 %v295, %v310
        %vm312 = vcmask 24576
        %313 = vst.msk [vmem:[#allocation4] sm:$0x1] %vm312, %v311
        %v314 = vsel %vm298, %v279, -inf
        %v315 = vsel %vm299, %v281, -inf
        %vm316 = vcmask 31752
        %v317 = vsel %vm316, %v314, -inf
        %318 = vmax.xlane.f32.xlu0 %v317
        %v319 = vpop.xlane.xlu0 %318
        %v320 = vsel %vm316, %v315, -inf
        %321 = vmax.xlane.f32.xlu0 %v320
        %v322 = vpop.xlane.xlu0 %321
        %v323 = vmax.f32 %v319, %v322
        %v324 = vrot.slane %v323, 4
        %v325 = vmax.f32 %v323, %v324
        %v326 = vrot.slane %v325, 2
        %v327 = vmax.f32 %v325, %v326
        %v328 = vrot.slane %v327, 1
        %v329 = vmax.f32 %v327, %v328
        %vm330 = vcmp.eq.f32.partialorder %v319, %v329
        %vm331 = vcmp.eq.f32.partialorder %v322, %v329
        %v332 = vsel %vm330, %v287, 16
        %v333 = vsel %vm331, %v288, 16
        %vm334 = vcmp.lt.s32.totalorder %v332, %v333
        %v335 = vsel %vm334, %v332, %v333
        %v336 = vrot.slane %v335, 4
        %vm337 = vcmp.lt.s32.totalorder %v335, %v336
        %v338 = vsel %vm337, %v335, %v336
        %v339 = vrot.slane %v338, 2
        %vm340 = vcmp.lt.s32.totalorder %v338, %v339
        %v341 = vsel %vm340, %v338, %v339
        %v342 = vrot.slane %v341, 1
        %vm343 = vcmp.lt.s32.totalorder %v341, %v342
        %v344 = vsel %vm343, %v341, %v342
        %vm345 = vcmp.eq.s32.totalorder %v287, %v344
        %vm346 = vcmp.eq.s32.totalorder %v288, %v344
        %v347 = vsel %vm345, 1, 0
        %v348 = vsel %vm346, 1, 0
        %vm349 = vcmp.eq.s32.totalorder %v347, 1
        %vm350 = vcmp.eq.s32.totalorder %v348, 1
        %v351 = vsel %vm349, %v279, 0.0
        %v352 = vsel %vm350, %v281, 0.0
        %v353 = vsel %vm283, %v351, 0.0
        %v354 = vsel %vm283, %v352, 0.0
        %v355 = vadd.f32 %v353, %v354
        %v356 = vrot.slane %v355, 4
        %v357 = vadd.f32 %v355, %v356
        %v358 = vrot.slane %v357, 2
        %v359 = vadd.f32 %v357, %v358
        %v360 = vrot.slane %v359, 1
        %v361 = vadd.f32 %v359, %v360
        %v362 = vld [vmem:[#allocation2] sm:$0x1]
        %vm363 = vcmp.gt.f32.partialorder %v329, %v362
        %v364 = vld [vmem:[#allocation3] sm:$0x1]
        %v365 = vsel %vm363, 1, 0
        %366 = vset.pattern.permute.xlu0 0
        %367 = vperm.xlu0 %366, %v365
        %v368 = vpop.permute.xlu0 %367
        %v369 = vperm.slane %v368, 0
        %vm370 = vcmp.eq.s32.totalorder %v369, 1
        %v371 = vsel %vm370, %v361, %v364
        %372 = vst.msk [vmem:[#allocation3] sm:$0x1] %vm312, %v371
        %v373 = vld [vmem:[#allocation2] sm:$0x1]
        %v374 = vsel %vm363, %v329, %v373
        %vm375 = vcmask 0
        %376 = vst.msk [vmem:[#allocation2] sm:$0x1] %vm375, %v374
        %p377 = scmp.eq.s32.totalorder %s19, 1
        // Predicated region
        $region41: #{tpu_custom_call.1} parent=35 // pred_check
          %p378 = pneg %p377
        $region42: #{tpu_custom_call.1} parent=35 // pred_check_branch
          %380 = sbr.rel (%p378) target = $region44
        $region43: #{tpu_custom_call.1} parent=35 // pred_region
          %s381 = sld [smem:[#allocation5]]
          %v382 = vld [vmem:[#allocation4] sm:$0x1]
          %v383 = vmul.f32 %v382, 0.041666668
          %v384 = vld [vmem:[#allocation3] sm:$0x1]
          %v385 = vstv %s381
          %v386 = vmul.f32 %v385, %v384
          %s387 = ssub.f32 1.0, %s381
          %v388 = vstv %s387
          %v389 = vmul.f32 %v388, %v383
          %v390 = vadd.f32 %v386, %v389
          %391 = vst.msk [vmem:[#allocation6] sm:$0x1] %vm312, %v390
        $region44: #{tpu_custom_call.1} parent=35 // pred_fallthru
          _
        %s392 = smul.u32 2, %s19
        %p393 = scmp.lt.s32.totalorder %s392, 3
        %s394 = scalar_select %p393, %s392, 3
        %s395 = smul.addr %s394, 8
        %s396 = scalar_lea.vmem %s4, %s395
        // Predicated region
        $region45: #{tpu_custom_call.1} parent=35 // pred_check
          %p397 = pneg %p126
        $region46: #{tpu_custom_call.1} parent=35 // pred_check_branch
          %399 = sbr.rel (%p397) target = $region48
        $region47: #{tpu_custom_call.1} parent=35 // pred_region
          %s400 = smul.u32 2, %s19
        $region48: #{tpu_custom_call.1} parent=35 // pred_fallthru
          _
        // Predicated region
        $region49: #{tpu_custom_call.1} parent=35 // pred_check
          %p401 = pneg %p147
        $region50: #{tpu_custom_call.1} parent=35 // pred_check_branch
          %403 = sbr.rel (%p401) target = $region52
        $region51: #{tpu_custom_call.1} parent=35 // pred_region
          %405 = vsyncadd [#allocation7], 0
          %s407 = sshll.u32 [#allocation6], 4
          %s408 = int_to_ptr.vmem [resolvable:$true] %s407
          %s409 = sshll.u32 %s5, 4
          %s410 = int_to_ptr.hbm [resolvable:$true] %s409
          %412 = dma.vmem_to_hbm [thread:$0]  %s408, 16, %s410, [#allocation7]
        $region52: #{tpu_custom_call.1} parent=35 // pred_fallthru
          _
        // Predicated region
        $region53: #{tpu_custom_call.1} parent=35 // pred_check
          %p413 = pneg %p147
        $region54: #{tpu_custom_call.1} parent=35 // pred_check_branch
          %415 = sbr.rel (%p413) target = $region56
        $region55: #{tpu_custom_call.1} parent=35 // pred_region
          %417 = dma.done [#allocation7], 16
        $region56: #{tpu_custom_call.1} parent=35 // pred_fallthru
          _
      $region36: #{tpu_custom_call.1} parent=5 // pred_fallthru
        _
      %p418 = scmp.le.s32.totalorder 2, %s14
      // Predicated region
      $region57: #{tpu_custom_call.1} parent=5 // pred_check
        %p419 = pneg %p418
      $region58: #{tpu_custom_call.1} parent=5 // pred_check_branch
        %421 = sbr.rel (%p419) target = $region60
      $region59: #{tpu_custom_call.1} parent=5 // pred_region
        %s422 = ssub.s32 %s14, 2
        // Predicated region
        $region61: #{tpu_custom_call.1} parent=59 // pred_check
          %p423 = pneg %p132
        $region62: #{tpu_custom_call.1} parent=59 // pred_check_branch
          %425 = sbr.rel (%p423) target = $region64
        $region63: #{tpu_custom_call.1} parent=59 // pred_region
          %s426 = smul.u32 2, %s20
          %p427 = scmp.lt.s32.totalorder %s426, 3
          %s428 = scalar_select %p427, %s426, 3
          %s429 = smul.addr %s428, 8
          %s430 = scalar_lea.vmem %s4, %s429
        $region64: #{tpu_custom_call.1} parent=59 // pred_fallthru
          _
      $region60: #{tpu_custom_call.1} parent=5 // pred_fallthru
        _
    $region6: #{tpu_custom_call.1} parent=1 // loop_footer
      %s18 = sadd.s32 1, %s14
    $region7: #{tpu_custom_call.1} parent=1 // loop_footer_branch
      %13 = sbr.rel target = $region3
    $region8: #{tpu_custom_call.1} parent=1 // loop_exit
      _
    %431 = vsyncpa [#allocation7], 1
    %s432 = scalar_lea.sflag [#allocation7], 1
    %433 = vsyncpa %s432, 1

</llo_original>
